<compile_context>
chip_gen: v7x
topology: tpu7x:2x2x1
jax: 0.10.0
libtpu: 0.0.40
codegen_flags: <defaults>
</compile_context>

<pallas_src>
import math

import jax
import jax.numpy as jnp
from jax.experimental import pallas as pl
from jax.experimental.pallas import tpu as pltpu

MAX_PERIOD = 10000.0
_LOG_MAX_PERIOD = math.log(MAX_PERIOD)
_MM_DTYPE = jnp.bfloat16      # MXU input dtype (f32 accumulation)
_LANE = 128
_SUBLANE = 8


def _round_up(x, m):
    return (x + m - 1) // m * m


def _pad_to(a, shape):
    pads = [(0, s - d) for d, s in zip(a.shape, shape)]
    if any(p for _, p in pads):
        a = jnp.pad(a, pads)
    return a


def _timestep_embedder_kernel(t_ref, freqs_ref, w1_ref, b1_ref, w2_ref, b2_ref,
                              out_ref):
    """Fused: sinusoidal embedding -> Linear -> SiLU -> Linear.

    t_ref    : (tile_n, 1)   f32   (streamed per grid step)
    freqs_ref: (1, half)     f32   (resident)
    w1_ref   : (2*half, Hp)  bf16  (resident)
    b1_ref   : (1, Hp)       f32   (resident)
    w2_ref   : (Hp, Hp)      bf16  (resident)
    b2_ref   : (1, Hp)       f32   (resident)
    out_ref  : (tile_n, Hp)  f32
    """
    half = freqs_ref.shape[-1]

    # args = t[:, None] * freqs[None, :]   (f32 on the VPU)
    args = t_ref[...] * freqs_ref[...]

    # First Linear, split so no lane-axis concat is materialized:
    #   emb @ W1 == cos(args) @ W1[:half] + sin(args) @ W1[half:]
    cos_a = jnp.cos(args).astype(_MM_DTYPE)
    sin_a = jnp.sin(args).astype(_MM_DTYPE)
    h = jnp.dot(cos_a, w1_ref[pl.ds(0, half), :],
                preferred_element_type=jnp.float32)
    h = h + jnp.dot(sin_a, w1_ref[pl.ds(half, half), :],
                    preferred_element_type=jnp.float32)
    h = h + b1_ref[...]

    # SiLU in f32 (EUP sigmoid; keep elementwise math out of bf16 for v5e).
    h = h * jax.nn.sigmoid(h)

    # Second Linear (bf16 MXU inputs, f32 accumulation).
    out = jnp.dot(h.astype(_MM_DTYPE), w2_ref[...],
                  preferred_element_type=jnp.float32)
    out_ref[...] = (out + b2_ref[...]).astype(out_ref.dtype)


def timestep_embedder(t, w1, b1, w2, b2, *, tile_n=512):
    """t: (N,) float-ish; w1: (F, H); b1: (H,); w2: (H, H); b2: (H,).

    Returns (N, H) float32, matching the PyTorch TimestepEmbedder forward.
    """
    n = t.shape[0]
    f, h = w1.shape
    assert f % 2 == 0, "odd frequency_embedding_size not supported"
    # TODO(synk): the `dim % 2` zero-pad branch of timestep_embedding is
    # omitted (default frequency_embedding_size=256 is even).
    half = f // 2
    hp = _round_up(h, _LANE)           # lane-dense hidden size

    # Pad / cast parameters once. Zero-padded columns/rows contribute nothing
    # and the padded output columns are sliced off below.
    w1p = _pad_to(w1.astype(jnp.float32), (f, hp)).astype(_MM_DTYPE)
    w2p = _pad_to(w2.astype(jnp.float32), (hp, hp)).astype(_MM_DTYPE)
    b1p = _pad_to(b1.astype(jnp.float32).reshape(1, h), (1, hp))
    b2p = _pad_to(b2.astype(jnp.float32).reshape(1, h), (1, hp))
    freqs = jnp.exp(
        (-_LOG_MAX_PERIOD / half) * jnp.arange(half, dtype=jnp.float32)
    ).reshape(1, half)

    use_grid = n > tile_n
    if use_grid:
        n_pad = _round_up(n, tile_n)
    else:
        tile_n = _round_up(max(n, _SUBLANE), _SUBLANE)
        n_pad = tile_n
    t2d = _pad_to(t.astype(jnp.float32).reshape(n, 1), (n_pad, 1))

    # VMEM budget: resident params (x2 pipeline buffers) + double-buffered
    # t/out tiles + rough intermediate slabs. Sized with headroom but kept
    # well under v7x's 64 MiB physical VMEM.
    param_bytes = ((w1p.size + w2p.size) * 2
                   + (b1p.size + b2p.size + freqs.size) * 4)
    stream_bytes = 2 * tile_n * (1 + hp) * 4
    interm_bytes = tile_n * (f + 2 * hp) * 4
    vmem_limit = min(
        max(int((2 * param_bytes + stream_bytes + interm_bytes) * 1.5),
            16 * 1024 * 1024),
        48 * 1024 * 1024)

    cost = pl.CostEstimate(
        flops=2 * n_pad * (f * hp + hp * hp),
        transcendentals=n_pad * (f + hp),          # cos + sin + sigmoid
        bytes_accessed=param_bytes + n_pad * (1 + hp) * 4,
    )

    if use_grid:
        grid_spec = pltpu.PrefetchScalarGridSpec(
            num_scalar_prefetch=0,
            grid=(n_pad // tile_n,),
            in_specs=[
                pl.BlockSpec((tile_n, 1), lambda i: (i, 0)),   # t: streamed
                pl.BlockSpec((1, half), lambda i: (0, 0)),     # freqs: resident
                pl.BlockSpec((f, hp), lambda i: (0, 0)),       # w1: resident
                pl.BlockSpec((1, hp), lambda i: (0, 0)),       # b1: resident
                pl.BlockSpec((hp, hp), lambda i: (0, 0)),      # w2: resident
                pl.BlockSpec((1, hp), lambda i: (0, 0)),       # b2: resident
            ],
            out_specs=pl.BlockSpec((tile_n, hp), lambda i: (i, 0)),
        )
        out = pl.pallas_call(
            _timestep_embedder_kernel,
            out_shape=jax.ShapeDtypeStruct((n_pad, hp), jnp.float32),
            grid_spec=grid_spec,
            compiler_params=pltpu.CompilerParams(
                dimension_semantics=("parallel",),   # 2-TC split on v7x
                vmem_limit_bytes=vmem_limit,
            ),
            cost_estimate=cost,
        )(t2d, freqs, w1p, b1p, w2p, b2p)
    else:
        # Small-N path: single block, no grid (kernel is launch/DMA-latency
        # bound here; extra grid steps would only add overhead).
        vmem = pl.BlockSpec(memory_space=pltpu.MemorySpace.VMEM)
        out = pl.pallas_call(
            _timestep_embedder_kernel,
            out_shape=jax.ShapeDtypeStruct((n_pad, hp), jnp.float32),
            in_specs=[vmem] * 6,
            out_specs=vmem,
            compiler_params=pltpu.CompilerParams(vmem_limit_bytes=vmem_limit),
            cost_estimate=cost,
        )(t2d, freqs, w1p, b1p, w2p, b2p)

    return out[:n, :h]


def _reference(t, w1, b1, w2, b2):
    """Pure-JAX (f32) reference mirroring the PyTorch forward exactly."""
    f = w1.shape[0]
    half = f // 2
    freqs = jnp.exp(
        -_LOG_MAX_PERIOD * jnp.arange(half, dtype=jnp.float32) / half)
    args = t.astype(jnp.float32)[:, None] * freqs[None]
    emb = jnp.concatenate([jnp.cos(args), jnp.sin(args)], axis=-1)
    hid = emb @ w1 + b1
    hid = hid * jax.nn.sigmoid(hid)
    return hid @ w2 + b2


if __name__ == "__main__":
    HIDDEN = 32          # hidden_size (padded to 128 lanes inside the wrapper)
    FREQ = 256           # frequency_embedding_size

    key = jax.random.PRNGKey(0)
    k_t, k_w1, k_b1, k_w2, k_b2 = jax.random.split(key, 5)

    w1 = jax.random.normal(k_w1, (FREQ, HIDDEN), jnp.float32) * 0.02
    b1 = jax.random.normal(k_b1, (HIDDEN,), jnp.float32) * 0.02
    w2 = jax.random.normal(k_w2, (HIDDEN, HIDDEN), jnp.float32) * 0.02
    b2 = jax.random.normal(k_b2, (HIDDEN,), jnp.float32) * 0.02

    # 1) Small-N (no-grid) path.
    t_small = jax.random.uniform(k_t, (8,), jnp.float32) * 1000.0
    out_small = jax.block_until_ready(
        timestep_embedder(t_small, w1, b1, w2, b2))
    ref_small = _reference(t_small, w1, b1, w2, b2)
    assert out_small.shape == (8, HIDDEN), out_small.shape
    # bf16 MXU inputs with f32 accumulation -> tolerance widened accordingly.
    assert jnp.allclose(out_small, ref_small, atol=5e-3, rtol=5e-2), float(
        jnp.max(jnp.abs(out_small - ref_small)))

    # 2) Grid path (tile_n shrunk so small shapes still exercise the pipeline,
    #    resident weights, and the "parallel" batch axis).
    t_big = jax.random.uniform(k_t, (160,), jnp.float32) * 1000.0
    out_big = jax.block_until_ready(
        timestep_embedder(t_big, w1, b1, w2, b2, tile_n=64))
    ref_big = _reference(t_big, w1, b1, w2, b2)
    assert out_big.shape == (160, HIDDEN), out_big.shape
    assert jnp.allclose(out_big, ref_big, atol=5e-3, rtol=5e-2), float(
        jnp.max(jnp.abs(out_big - ref_big)))

    print("KERNEL_OK")
</pallas_src>

<mosaic_0001>
module attributes {stable_mosaic.version = 11 : i64} {
  func.func @_timestep_embedder_kernel(%arg0: memref<8x1xf32, #tpu.memory_space<vmem>>, %arg1: memref<1x128xf32, #tpu.memory_space<vmem>>, %arg2: memref<256x128xbf16, #tpu.memory_space<vmem>>, %arg3: memref<1x128xf32, #tpu.memory_space<vmem>>, %arg4: memref<128x128xbf16, #tpu.memory_space<vmem>>, %arg5: memref<1x128xf32, #tpu.memory_space<vmem>>, %arg6: memref<8x128xf32, #tpu.memory_space<vmem>>) attributes {dimension_semantics = [], scalar_prefetch = 0 : i64, scratch_operands = 0 : i64, tpu.core_type = #tpu.core_type<tc>} {
    %c0 = arith.constant 0 : index
    %c0_0 = arith.constant 0 : index
    %0 = vector.load %arg0[%c0, %c0_0] : memref<8x1xf32, #tpu.memory_space<vmem>>, vector<8x1xf32>
    %c0_1 = arith.constant 0 : index
    %c0_2 = arith.constant 0 : index
    %1 = vector.load %arg1[%c0_1, %c0_2] : memref<1x128xf32, #tpu.memory_space<vmem>>, vector<1x128xf32>
    %2 = vector.broadcast %0 : vector<8x1xf32> to vector<8x128xf32>
    %3 = vector.broadcast %1 : vector<1x128xf32> to vector<8x128xf32>
    %4 = arith.mulf %2, %3 : vector<8x128xf32>
    %5 = math.cos %4 : vector<8x128xf32>
    %6 = arith.truncf %5 : vector<8x128xf32> to vector<8x128xbf16>
    %7 = math.sin %4 : vector<8x128xf32>
    %8 = arith.truncf %7 : vector<8x128xf32> to vector<8x128xbf16>
    %c0_3 = arith.constant 0 : index
    %c0_4 = arith.constant 0 : index
    %9 = vector.load %arg2[%c0_3, %c0_4] : memref<256x128xbf16, #tpu.memory_space<vmem>>, vector<128x128xbf16>
    %cst = arith.constant dense<0.000000e+00> : vector<8x128xf32>
    %10 = tpu.matmul %6, %9, %cst {dimension_numbers = #tpu.dot_dimension_numbers<[1], [0], [0], [1], [0, 0, 1, 1], [], []>} : vector<8x128xbf16>, vector<128x128xbf16>, vector<8x128xf32> -> vector<8x128xf32>
    %c128 = arith.constant 128 : index
    %c0_5 = arith.constant 0 : index
    %11 = vector.load %arg2[%c128, %c0_5] : memref<256x128xbf16, #tpu.memory_space<vmem>>, vector<128x128xbf16>
    %cst_6 = arith.constant dense<0.000000e+00> : vector<8x128xf32>
    %12 = tpu.matmul %8, %11, %cst_6 {dimension_numbers = #tpu.dot_dimension_numbers<[1], [0], [0], [1], [0, 0, 1, 1], [], []>} : vector<8x128xbf16>, vector<128x128xbf16>, vector<8x128xf32> -> vector<8x128xf32>
    %13 = arith.addf %10, %12 : vector<8x128xf32>
    %c0_7 = arith.constant 0 : index
    %c0_8 = arith.constant 0 : index
    %14 = vector.load %arg3[%c0_7, %c0_8] : memref<1x128xf32, #tpu.memory_space<vmem>>, vector<1x128xf32>
    %15 = vector.broadcast %14 : vector<1x128xf32> to vector<8x128xf32>
    %16 = arith.addf %13, %15 : vector<8x128xf32>
    %17 = arith.negf %16 : vector<8x128xf32>
    %18 = math.exp %17 : vector<8x128xf32>
    %cst_9 = arith.constant 1.000000e+00 : f32
    %19 = vector.broadcast %cst_9 : f32 to vector<8x128xf32>
    %20 = arith.addf %19, %18 : vector<8x128xf32>
    %21 = arith.divf %19, %20 : vector<8x128xf32>
    %22 = arith.mulf %16, %21 : vector<8x128xf32>
    %23 = arith.truncf %22 : vector<8x128xf32> to vector<8x128xbf16>
    %c0_10 = arith.constant 0 : index
    %c0_11 = arith.constant 0 : index
    %24 = vector.load %arg4[%c0_10, %c0_11] : memref<128x128xbf16, #tpu.memory_space<vmem>>, vector<128x128xbf16>
    %cst_12 = arith.constant dense<0.000000e+00> : vector<8x128xf32>
    %25 = tpu.matmul %23, %24, %cst_12 {dimension_numbers = #tpu.dot_dimension_numbers<[1], [0], [0], [1], [0, 0, 1, 1], [], []>} : vector<8x128xbf16>, vector<128x128xbf16>, vector<8x128xf32> -> vector<8x128xf32>
    %c0_13 = arith.constant 0 : index
    %c0_14 = arith.constant 0 : index
    %26 = vector.load %arg5[%c0_13, %c0_14] : memref<1x128xf32, #tpu.memory_space<vmem>>, vector<1x128xf32>
    %27 = vector.broadcast %26 : vector<1x128xf32> to vector<8x128xf32>
    %28 = arith.addf %25, %27 : vector<8x128xf32>
    %c0_15 = arith.constant 0 : index
    %c0_16 = arith.constant 0 : index
    %29 = vector.load %arg6[%c0_15, %c0_16] : memref<8x128xf32, #tpu.memory_space<vmem>>, vector<8x128xf32>
    tpu.vector_store %arg6[%c0_15, %c0_16], %28 {strides = array<i32>} : memref<8x128xf32, #tpu.memory_space<vmem>>, vector<8x128xf32>,
    return
  }
}

</mosaic_0001>

<llo_original>
// kernel: tpu_custom_call.1
$region0: #{tpu_custom_call.1}
  #allocation0 [shape = 'u32[]', space=smem, size = 0x4, offset = 0x4, fixed_abs, tag = 'smem constant byte address 0x4 - core index']
  #allocation1 [shape = 'u32[144,128]{1,0:T(1,128)}', space=vmem, size = 0x12000, scoped, tag = 'internal scratch']
  %s0 = inlined_call_operand.vmem [shape: f32[8,1], index: 0, kind: input, shape index: {}]
  %s1 = inlined_call_operand.vmem [shape: f32[1,128], index: 1, kind: input, shape index: {}]
  %s2 = inlined_call_operand.hbm [shape: bf16[256,128], index: 2, kind: input, shape index: {}]
  %s3 = inlined_call_operand.vmem [shape: f32[1,128], index: 3, kind: input, shape index: {}]
  %s4 = inlined_call_operand.hbm [shape: bf16[128,128], index: 4, kind: input, shape index: {}]
  %s5 = inlined_call_operand.vmem [shape: f32[1,128], index: 5, kind: input, shape index: {}]
  %s6 = inlined_call_operand.hbm [shape: f32[8,128], index: 6, kind: output, shape index: {}]
  %s7 = sld [smem:[#allocation0]]
  $region42: #{tpu_custom_call.1} parent=0
    _
  %s9 = ssub.s32 1, %s7
  %s10 = scalar_select 0, %s9, %s7
  $region1: #{tpu_custom_call.1} parent=0
    #allocation2 [shape = 'u8[65536]{0}', space=vmem, size = 0x10000, scoped, tag = 'input window, operand 2, single buffered']
    #allocation3 [shape = 's32[1]{0}', space=sflag, size = 0x4, scoped, tag = 'scoped memory for tpu_custom_call.1']
    #allocation4 [shape = 's32[1]{0}', space=sflag, size = 0x4, scoped, tag = 'scoped memory for tpu_custom_call.1']
    #allocation5 [shape = 'u8[32768]{0}', space=vmem, size = 0x8000, scoped, tag = 'input window, operand 4, single buffered']
    #allocation6 [shape = 's32[1]{0}', space=sflag, size = 0x4, scoped, tag = 'scoped memory for tpu_custom_call.1']
    #allocation7 [shape = 'u8[4096]{0}', space=vmem, size = 0x1000, scoped, tag = 'output window, operand 0, single buffered']
    %11 = vsyncpa [#allocation3], 0
    %12 = vsyncpa [#allocation6], 0
    %13 = vsyncpa [#allocation4], 0
    // Predicated region
    $region2: #{tpu_custom_call.1} parent=1 // pred_check
      _
    $region3: #{tpu_custom_call.1} parent=1 // pred_check_branch
      %15 = sbr.rel (0) target = $region5
    $region4: #{tpu_custom_call.1} parent=1 // pred_region
      _
    $region5: #{tpu_custom_call.1} parent=1 // pred_fallthru
      _
    // Predicated region
    $region6: #{tpu_custom_call.1} parent=1 // pred_check
      _
    $region7: #{tpu_custom_call.1} parent=1 // pred_check_branch
      %17 = sbr.rel (0) target = $region9
    $region8: #{tpu_custom_call.1} parent=1 // pred_region
      _
    $region9: #{tpu_custom_call.1} parent=1 // pred_fallthru
      _
    // Predicated region
    $region10: #{tpu_custom_call.1} parent=1 // pred_check
      _
    $region11: #{tpu_custom_call.1} parent=1 // pred_check_branch
      %19 = sbr.rel (0) target = $region13
    $region12: #{tpu_custom_call.1} parent=1 // pred_region
      %s21 = ssub.s32 2048, 2048
      %22 = vsyncadd [#allocation3], %s21
      %s23 = sshll.u32 [#allocation2], 4
      %s24 = int_to_ptr.vmem [resolvable:$true] %s23
      %29 = dma.hbm_to_vmem [thread:$0]  %s2, 2048, %s24, [#allocation3], 64, 64, 4
    $region13: #{tpu_custom_call.1} parent=1 // pred_fallthru
      _
    // Predicated region
    $region14: #{tpu_custom_call.1} parent=1 // pred_check
      _
    $region15: #{tpu_custom_call.1} parent=1 // pred_check_branch
      %31 = sbr.rel (0) target = $region17
    $region16: #{tpu_custom_call.1} parent=1 // pred_region
      _
    $region17: #{tpu_custom_call.1} parent=1 // pred_fallthru
      _
    // Predicated region
    $region18: #{tpu_custom_call.1} parent=1 // pred_check
      _
    $region19: #{tpu_custom_call.1} parent=1 // pred_check_branch
      %33 = sbr.rel (0) target = $region21
    $region20: #{tpu_custom_call.1} parent=1 // pred_region
      %s35 = ssub.s32 1024, 1024
      %36 = vsyncadd [#allocation6], %s35
      %s37 = sshll.u32 [#allocation5], 4
      %s38 = int_to_ptr.vmem [resolvable:$true] %s37
      %43 = dma.hbm_to_vmem [thread:$0]  %s4, 1024, %s38, [#allocation6], 64, 64, 4
    $region21: #{tpu_custom_call.1} parent=1 // pred_fallthru
      _
    // Predicated region
    $region22: #{tpu_custom_call.1} parent=1 // pred_check
      _
    $region23: #{tpu_custom_call.1} parent=1 // pred_check_branch
      %45 = sbr.rel (0) target = $region25
    $region24: #{tpu_custom_call.1} parent=1 // pred_region
      _
    $region25: #{tpu_custom_call.1} parent=1 // pred_fallthru
      _
    // Predicated region
    $region26: #{tpu_custom_call.1} parent=1 // pred_check
      _
    $region27: #{tpu_custom_call.1} parent=1 // pred_check_branch
      %47 = sbr.rel (0) target = $region29
    $region28: #{tpu_custom_call.1} parent=1 // pred_region
      %48 = dma.done [#allocation3], 2048
    $region29: #{tpu_custom_call.1} parent=1 // pred_fallthru
      _
    // Predicated region
    $region30: #{tpu_custom_call.1} parent=1 // pred_check
      _
    $region31: #{tpu_custom_call.1} parent=1 // pred_check_branch
      %50 = sbr.rel (0) target = $region33
    $region32: #{tpu_custom_call.1} parent=1 // pred_region
      %51 = dma.done [#allocation6], 1024
    $region33: #{tpu_custom_call.1} parent=1 // pred_fallthru
      _
    %v53 = vld [vmem:[%s0] sm:$0xff]
    %v54 = vld [vmem:[%s1] sm:$0x1]
    %56 = vset.pattern.permute.xlu0 0
    %57 = vperm.xlu0 %56, %v53
    %v58 = vpop.permute.xlu0 %57
    %v61 = vlaneseq
    %v62 = vshrl.u32 %v61, 7
    %v63 = vsub.s32 0, %v62
    %v64 = vrot.slane %v54, %v63
    %v66 = vmul.f32 %v58, %v64
    %v67 = vand.u32 2147483647, %v66
    %vm68 = vcmp.le.f32.partialorder %v67, 0.7853982
    %vm69 = vcmp.lt.s32.totalorder %v66, 0
    %v70 = vand.u32 %v66, 2139095040
    %v71 = vshrl.u32 %v70, 23
    %v72 = vsub.s32 %v71, 127
    %v73 = vand.u32 2147483647, %v66
    %v74 = vand.u32 %v73, 8388607
    %v75 = vor.u32 %v74, 8388608
    %v76 = vsub.s32 0, %v75
    %v77 = vadd.s32 %v72, 1
    %vm78 = vcmp.gt.s32.totalorder %v77, 0
    %v79 = vsel %vm78, %v77, 0
    %v80 = vshrl.u32 %v79, 5
    %v81 = vand.u32 %v79, 31
    %v82 = vsub.s32 32, %v81
    %v83 = vshrl.u32 683565275, %v82
    %v84 = vshll.u32 683565275, %v81
    %v85 = vshrl.u32 2475754826, %v82
    %v86 = vor.u32 %v84, %v85
    %v87 = vshll.u32 2475754826, %v81
    %v88 = vshrl.u32 2131351028, %v82
    %v89 = vor.u32 %v87, %v88
    %v90 = vshll.u32 2131351028, %v81
    %v91 = vshrl.u32 2102212464, %v82
    %v92 = vor.u32 %v90, %v91
    %v93 = vshll.u32 2102212464, %v81
    %v94 = vshrl.u32 920167782, %v82
    %v95 = vor.u32 %v93, %v94
    %v96 = vshll.u32 920167782, %v81
    %v97 = vshrl.u32 1326507024, %v82
    %v98 = vor.u32 %v96, %v97
    %vm99 = vcmp.lt.s32.totalorder %v80, 1
    %vm100 = vcmp.lt.s32.totalorder %v80, 2
    %vm101 = vcmp.lt.s32.totalorder %v80, 3
    %vm102 = vcmp.lt.s32.totalorder %v80, 4
    %v103 = vsel %vm99, %v83, %v86
    %v104 = vsel %vm102, %v92, 2102212464
    %v105 = vsel %vm101, %v89, %v104
    %v106 = vsel %vm100, %v103, %v105
    %v107 = vsel %vm99, %v86, %v89
    %v108 = vsel %vm102, %v95, 920167782
    %v109 = vsel %vm101, %v92, %v108
    %v110 = vsel %vm100, %v107, %v109
    %v111 = vsel %vm99, %v89, %v92
    %v112 = vsel %vm102, %v98, 1326507024
    %v113 = vsel %vm101, %v95, %v112
    %v114 = vsel %vm100, %v111, %v113
    %v115 = vshll.u32 %v75, 8
    %v116 = vmul.u32.u64.compose %v115, %v114
    %v117 = vextract.low.u32 %v116
    %v118 = vextract.high.u32 %v116
    %v119 = vmul.u32.u64.compose %v115, %v110
    %v120 = vextract.low.u32 %v119
    %v121 = vextract.high.u32 %v119
    %v122 = vmul.u32 %v115, %v106
    %v123 = vadd.s32 %v118, %v120
    %vm124 = vc.u32 %v118, %v120
    %v125 = vadd.s32 %v121, 1
    %v126 = vsel %vm124, %v125, %v121
    %v127 = vadd.s32 %v122, %v126
    %v128 = vadd.s32 %v127, 536870912
    %v129 = vshrl.u32 %v128, 30
    %v130 = vshll.u32 %v129, 30
    %v131 = vsub.s32 %v127, %v130
    %vm132 = vcmp.lt.s32.totalorder %v131, 0
    %v133 = vsub.s32 0, %v131
    %v134 = vsel %vm132, %v133, %v131
    %v135 = vclz %v134
    %v136 = vsub.s32 %v135, 2
    %vm137 = vcmp.gt.s32.totalorder 0, %v136
    %v138 = vsel %vm137, 0, %v136
    %v139 = vsub.s32 32, %v138
    %v140 = vshll.u32 %v131, %v138
    %v141 = vshrl.u32 %v123, %v139
    %v142 = vor.u32 %v140, %v141
    %v143 = vsub.s32 4294967266, %v138
    %v144 = vadd.s32 %v143, 127
    %v145 = vshll.u32 %v144, 23
    %v146 = vor.u32 4788187, %v145
    %v147 = vand.u32 2147483647, %v146
    %v149 = vcvt.s32.f32 %v142
    %v150 = vmul.f32 %v149, %v147
    %v151 = vxor.u32 %v150, 2147483648
    %v152 = vsel %vm69, %v151, %v150
    %v153 = vsub.s32 4, %v129
    %v154 = vsel %vm69, %v153, %v129
    %v155 = vsel %vm68, %v66, %v152
    %v156 = vsel %vm68, 0, %v154
    %v157 = vcosq.f32.pop %v155
    %v158 = vsinq.f32.pop %v155
    %vm159 = vweird.f32 %v66
    %v160 = vand.u32 %v156, 3
    %vm161 = vcmp.lt.s32.totalorder %v160, 2
    %vm162 = vcmp.eq.s32.totalorder %v160, 0
    %v163 = vxor.u32 %v158, 2147483648
    %v164 = vsel %vm162, %v157, %v163
    %vm165 = vcmp.eq.s32.totalorder %v160, 2
    %v166 = vxor.u32 %v157, 2147483648
    %v167 = vsel %vm165, %v166, %v158
    %v168 = vsel %vm161, %v164, %v167
    %v169 = vsel %vm159, nan, %v168
    %v170 = vpack.c.bf16 %v169, %v169
    %v171 = vand.u32 2147483647, %v66
    %vm172 = vcmp.le.f32.partialorder %v171, 0.7853982
    %vm173 = vcmp.lt.s32.totalorder %v66, 0
    %v174 = vand.u32 %v66, 2139095040
    %v175 = vshrl.u32 %v174, 23
    %v176 = vsub.s32 %v175, 127
    %v177 = vand.u32 2147483647, %v66
    %v178 = vand.u32 %v177, 8388607
    %v179 = vor.u32 %v178, 8388608
    %v180 = vsub.s32 0, %v179
    %v181 = vadd.s32 %v176, 1
    %vm182 = vcmp.gt.s32.totalorder %v181, 0
    %v183 = vsel %vm182, %v181, 0
    %v184 = vshrl.u32 %v183, 5
    %v185 = vand.u32 %v183, 31
    %v186 = vsub.s32 32, %v185
    %v187 = vshrl.u32 683565275, %v186
    %v188 = vshll.u32 683565275, %v185
    %v189 = vshrl.u32 2475754826, %v186
    %v190 = vor.u32 %v188, %v189
    %v191 = vshll.u32 2475754826, %v185
    %v192 = vshrl.u32 2131351028, %v186
    %v193 = vor.u32 %v191, %v192
    %v194 = vshll.u32 2131351028, %v185
    %v195 = vshrl.u32 2102212464, %v186
    %v196 = vor.u32 %v194, %v195
    %v197 = vshll.u32 2102212464, %v185
    %v198 = vshrl.u32 920167782, %v186
    %v199 = vor.u32 %v197, %v198
    %v200 = vshll.u32 920167782, %v185
    %v201 = vshrl.u32 1326507024, %v186
    %v202 = vor.u32 %v200, %v201
    %vm203 = vcmp.lt.s32.totalorder %v184, 1
    %vm204 = vcmp.lt.s32.totalorder %v184, 2
    %vm205 = vcmp.lt.s32.totalorder %v184, 3
    %vm206 = vcmp.lt.s32.totalorder %v184, 4
    %v207 = vsel %vm203, %v187, %v190
    %v208 = vsel %vm206, %v196, 2102212464
    %v209 = vsel %vm205, %v193, %v208
    %v210 = vsel %vm204, %v207, %v209
    %v211 = vsel %vm203, %v190, %v193
    %v212 = vsel %vm206, %v199, 920167782
    %v213 = vsel %vm205, %v196, %v212
    %v214 = vsel %vm204, %v211, %v213
    %v215 = vsel %vm203, %v193, %v196
    %v216 = vsel %vm206, %v202, 1326507024
    %v217 = vsel %vm205, %v199, %v216
    %v218 = vsel %vm204, %v215, %v217
    %v219 = vshll.u32 %v179, 8
    %v220 = vmul.u32.u64.compose %v219, %v218
    %v221 = vextract.low.u32 %v220
    %v222 = vextract.high.u32 %v220
    %v223 = vmul.u32.u64.compose %v219, %v214
    %v224 = vextract.low.u32 %v223
    %v225 = vextract.high.u32 %v223
    %v226 = vmul.u32 %v219, %v210
    %v227 = vadd.s32 %v222, %v224
    %vm228 = vc.u32 %v222, %v224
    %v229 = vadd.s32 %v225, 1
    %v230 = vsel %vm228, %v229, %v225
    %v231 = vadd.s32 %v226, %v230
    %v232 = vadd.s32 %v231, 536870912
    %v233 = vshrl.u32 %v232, 30
    %v234 = vshll.u32 %v233, 30
    %v235 = vsub.s32 %v231, %v234
    %vm236 = vcmp.lt.s32.totalorder %v235, 0
    %v237 = vsub.s32 0, %v235
    %v238 = vsel %vm236, %v237, %v235
    %v239 = vclz %v238
    %v240 = vsub.s32 %v239, 2
    %vm241 = vcmp.gt.s32.totalorder 0, %v240
    %v242 = vsel %vm241, 0, %v240
    %v243 = vsub.s32 32, %v242
    %v244 = vshll.u32 %v235, %v242
    %v245 = vshrl.u32 %v227, %v243
    %v246 = vor.u32 %v244, %v245
    %v247 = vsub.s32 4294967266, %v242
    %v248 = vadd.s32 %v247, 127
    %v249 = vshll.u32 %v248, 23
    %v250 = vor.u32 4788187, %v249
    %v251 = vand.u32 2147483647, %v250
    %v253 = vcvt.s32.f32 %v246
    %v254 = vmul.f32 %v253, %v251
    %v255 = vxor.u32 %v254, 2147483648
    %v256 = vsel %vm173, %v255, %v254
    %v257 = vsub.s32 4, %v233
    %v258 = vsel %vm173, %v257, %v233
    %v259 = vsel %vm172, %v66, %v256
    %v260 = vsel %vm172, 0, %v258
    %v261 = vcosq.f32.pop %v259
    %v262 = vsinq.f32.pop %v259
    %vm263 = vweird.f32 %v66
    %v264 = vadd.s32 %v260, 3
    %v265 = vand.u32 %v264, 3
    %vm266 = vcmp.lt.s32.totalorder %v265, 2
    %vm267 = vcmp.eq.s32.totalorder %v265, 0
    %v268 = vxor.u32 %v262, 2147483648
    %v269 = vsel %vm267, %v261, %v268
    %vm270 = vcmp.eq.s32.totalorder %v265, 2
    %v271 = vxor.u32 %v261, 2147483648
    %v272 = vsel %vm270, %v271, %v262
    %v273 = vsel %vm266, %v269, %v272
    %v274 = vsel %vm263, nan, %v273
    %v275 = vpack.c.bf16 %v274, %v274
    %v276 = vld [vmem:[#allocation2] sm:$0xf]
    %v277 = vld [vmem:[#allocation2 + $0x4] sm:$0xf]
    %v278 = vld [vmem:[#allocation2 + $0x8] sm:$0xf]
    %v279 = vld [vmem:[#allocation2 + $0xc] sm:$0xf]
    %v280 = vld [vmem:[#allocation2 + $0x10] sm:$0xf]
    %v281 = vld [vmem:[#allocation2 + $0x14] sm:$0xf]
    %v282 = vld [vmem:[#allocation2 + $0x18] sm:$0xf]
    %v283 = vld [vmem:[#allocation2 + $0x1c] sm:$0xf]
    %v284 = vld [vmem:[#allocation2 + $0x20] sm:$0xf]
    %v285 = vld [vmem:[#allocation2 + $0x24] sm:$0xf]
    %v286 = vld [vmem:[#allocation2 + $0x28] sm:$0xf]
    %v287 = vld [vmem:[#allocation2 + $0x2c] sm:$0xf]
    %v288 = vld [vmem:[#allocation2 + $0x30] sm:$0xf]
    %v289 = vld [vmem:[#allocation2 + $0x34] sm:$0xf]
    %v290 = vld [vmem:[#allocation2 + $0x38] sm:$0xf]
    %v291 = vld [vmem:[#allocation2 + $0x3c] sm:$0xf]
    %v292 = vld [vmem:[#allocation2 + $0x40] sm:$0xf]
    %v293 = vld [vmem:[#allocation2 + $0x44] sm:$0xf]
    %v294 = vld [vmem:[#allocation2 + $0x48] sm:$0xf]
    %v295 = vld [vmem:[#allocation2 + $0x4c] sm:$0xf]
    %v296 = vld [vmem:[#allocation2 + $0x50] sm:$0xf]
    %v297 = vld [vmem:[#allocation2 + $0x54] sm:$0xf]
    %v298 = vld [vmem:[#allocation2 + $0x58] sm:$0xf]
    %v299 = vld [vmem:[#allocation2 + $0x5c] sm:$0xf]
    %v300 = vld [vmem:[#allocation2 + $0x60] sm:$0xf]
    %v301 = vld [vmem:[#allocation2 + $0x64] sm:$0xf]
    %v302 = vld [vmem:[#allocation2 + $0x68] sm:$0xf]
    %v303 = vld [vmem:[#allocation2 + $0x6c] sm:$0xf]
    %v304 = vld [vmem:[#allocation2 + $0x70] sm:$0xf]
    %v305 = vld [vmem:[#allocation2 + $0x74] sm:$0xf]
    %v306 = vld [vmem:[#allocation2 + $0x78] sm:$0xf]
    %v307 = vld [vmem:[#allocation2 + $0x7c] sm:$0xf]
    %v324 = vunpack.c.l.b16 %v292
    %v325 = vunpack.c.l.b16 %v293
    %v326 = vunpack.c.l.b16 %v294
    %v327 = vunpack.c.l.b16 %v295
    %v328 = vunpack.c.l.b16 %v296
    %v329 = vunpack.c.l.b16 %v297
    %v330 = vunpack.c.l.b16 %v298
    %v331 = vunpack.c.l.b16 %v299
    %v332 = vunpack.c.l.b16 %v300
    %v333 = vunpack.c.l.b16 %v301
    %v334 = vunpack.c.l.b16 %v302
    %v335 = vunpack.c.l.b16 %v303
    %v336 = vunpack.c.l.b16 %v304
    %v337 = vunpack.c.l.b16 %v305
    %v338 = vunpack.c.l.b16 %v306
    %v339 = vunpack.c.l.b16 %v307
    %v340 = vpack.c.b16 %v325, %v324
    %v341 = vpack.c.b16 %v327, %v326
    %v342 = vpack.c.b16 %v329, %v328
    %v343 = vpack.c.b16 %v331, %v330
    %v344 = vpack.c.b16 %v333, %v332
    %v345 = vpack.c.b16 %v335, %v334
    %v346 = vpack.c.b16 %v337, %v336
    %v347 = vpack.c.b16 %v339, %v338
    %356 = vmatprep.subr.bf16.mxu0 0
    %357 = vmatpush1.bf16.msra.mxu0 %v340
    %358 = vmatprep.subr.bf16.mxu0 0
    %359 = vmatpush1.bf16.msra.mxu0 %v341
    %360 = vmatprep.subr.bf16.mxu0 0
    %361 = vmatpush1.bf16.msra.mxu0 %v342
    %362 = vmatprep.subr.bf16.mxu0 0
    %363 = vmatpush1.bf16.msra.mxu0 %v343
    %364 = vmatprep.subr.bf16.mxu0 0
    %365 = vmatpush1.bf16.msra.mxu0 %v344
    %366 = vmatprep.subr.bf16.mxu0 0
    %367 = vmatpush1.bf16.msra.mxu0 %v345
    %368 = vmatprep.subr.bf16.mxu0 0
    %369 = vmatpush1.bf16.msra.mxu0 %v346
    %370 = vmatprep.subr.bf16.mxu0 0
    %371 = vmatpush1.bf16.msra.mxu0 %v347
    %372 = vmatprep.subr.bf16.mxu0 0
    %373 = vmatpush1.bf16.msra.mxu0 0
    %374 = vmatprep.subr.bf16.mxu0 0
    %375 = vmatpush1.bf16.msra.mxu0 0
    %376 = vmatprep.subr.bf16.mxu0 0
    %377 = vmatpush1.bf16.msra.mxu0 0
    %378 = vmatprep.subr.bf16.mxu0 0
    %379 = vmatpush1.bf16.msra.mxu0 0
    %380 = vmatprep.subr.bf16.mxu0 0
    %381 = vmatpush1.bf16.msra.mxu0 0
    %382 = vmatprep.subr.bf16.mxu0 0
    %383 = vmatpush1.bf16.msra.mxu0 0
    %384 = vmatprep.subr.bf16.mxu0 0
    %385 = vmatpush1.bf16.msra.mxu0 0
    %386 = vmatprep.subr.bf16.mxu0 0
    %387 = vmatpush1.bf16.msra.mxu0 0
    %388 = vmatprep.mubr.bf16.mxu0 0
    %389 = vmatmul.mubr.bf16.gmra.mrb[0].mxu0 %v275
    %v390 = vpop.f32.mrb[0].mxu0
    %v391 = vadd.f32 0.0, %v390
    %v392 = vpop.f32.mrb[0].mxu0
    %v393 = vpop.f32.mrb[0].mxu0
    %v394 = vpop.f32.mrb[0].mxu0
    %395 = vdwg.mxu0
    %v412 = vunpack.c.l.b16 %v276
    %v413 = vunpack.c.l.b16 %v277
    %v414 = vunpack.c.l.b16 %v278
    %v415 = vunpack.c.l.b16 %v279
    %v416 = vunpack.c.l.b16 %v280
    %v417 = vunpack.c.l.b16 %v281
    %v418 = vunpack.c.l.b16 %v282
    %v419 = vunpack.c.l.b16 %v283
    %v420 = vunpack.c.l.b16 %v284
    %v421 = vunpack.c.l.b16 %v285
    %v422 = vunpack.c.l.b16 %v286
    %v423 = vunpack.c.l.b16 %v287
    %v424 = vunpack.c.l.b16 %v288
    %v425 = vunpack.c.l.b16 %v289
    %v426 = vunpack.c.l.b16 %v290
    %v427 = vunpack.c.l.b16 %v291
    %v428 = vpack.c.b16 %v413, %v412
    %v429 = vpack.c.b16 %v415, %v414
    %v430 = vpack.c.b16 %v417, %v416
    %v431 = vpack.c.b16 %v419, %v418
    %v432 = vpack.c.b16 %v421, %v420
    %v433 = vpack.c.b16 %v423, %v422
    %v434 = vpack.c.b16 %v425, %v424
    %v435 = vpack.c.b16 %v427, %v426
    %444 = vmatprep.subr.bf16.mxu0 0
    %445 = vmatpush1.bf16.msra.mxu0 %v428
    %446 = vmatprep.subr.bf16.mxu0 0
    %447 = vmatpush1.bf16.msra.mxu0 %v429
    %448 = vmatprep.subr.bf16.mxu0 0
    %449 = vmatpush1.bf16.msra.mxu0 %v430
    %450 = vmatprep.subr.bf16.mxu0 0
    %451 = vmatpush1.bf16.msra.mxu0 %v431
    %452 = vmatprep.subr.bf16.mxu0 0
    %453 = vmatpush1.bf16.msra.mxu0 %v432
    %454 = vmatprep.subr.bf16.mxu0 0
    %455 = vmatpush1.bf16.msra.mxu0 %v433
    %456 = vmatprep.subr.bf16.mxu0 0
    %457 = vmatpush1.bf16.msra.mxu0 %v434
    %458 = vmatprep.subr.bf16.mxu0 0
    %459 = vmatpush1.bf16.msra.mxu0 %v435
    %460 = vmatprep.subr.bf16.mxu0 0
    %461 = vmatpush1.bf16.msra.mxu0 0
    %462 = vmatprep.subr.bf16.mxu0 0
    %463 = vmatpush1.bf16.msra.mxu0 0
    %464 = vmatprep.subr.bf16.mxu0 0
    %465 = vmatpush1.bf16.msra.mxu0 0
    %466 = vmatprep.subr.bf16.mxu0 0
    %467 = vmatpush1.bf16.msra.mxu0 0
    %468 = vmatprep.subr.bf16.mxu0 0
    %469 = vmatpush1.bf16.msra.mxu0 0
    %470 = vmatprep.subr.bf16.mxu0 0
    %471 = vmatpush1.bf16.msra.mxu0 0
    %472 = vmatprep.subr.bf16.mxu0 0
    %473 = vmatpush1.bf16.msra.mxu0 0
    %474 = vmatprep.subr.bf16.mxu0 0
    %475 = vmatpush1.bf16.msra.mxu0 0
    %476 = vmatprep.mubr.bf16.mxu0 0
    %477 = vmatmul.mubr.bf16.gmra.mrb[0].mxu0 %v170
    %v478 = vpop.f32.mrb[0].mxu0
    %v479 = vadd.f32 %v391, %v478
    %v480 = vpop.f32.mrb[0].mxu0
    %v481 = vpop.f32.mrb[0].mxu0
    %v482 = vpop.f32.mrb[0].mxu0
    %483 = vdwg.mxu0
    %v484 = vld [vmem:[%s3] sm:$0x1]
    %v486 = vlaneseq
    %v487 = vshrl.u32 %v486, 7
    %v488 = vsub.s32 0, %v487
    %v489 = vrot.slane %v484, %v488
    %v491 = vadd.f32 %v479, %v489
    %v492 = vxor.u32 %v491, 2147483648
    %v493 = vmul.f32 %v492, 1.442695
    %v494 = vpow.pop %v493
    %v495 = vadd.f32 %v494, 1.0
    %v496 = vrcp.pop %v495
    %v497 = vmul.f32 1.0, %v496
    %v498 = vmul.f32 %v491, %v497
    %v499 = vpack.c.bf16 %v498, %v498
    %v500 = vld [vmem:[#allocation5] sm:$0xf]
    %v501 = vld [vmem:[#allocation5 + $0x4] sm:$0xf]
    %v502 = vld [vmem:[#allocation5 + $0x8] sm:$0xf]
    %v503 = vld [vmem:[#allocation5 + $0xc] sm:$0xf]
    %v504 = vld [vmem:[#allocation5 + $0x10] sm:$0xf]
    %v505 = vld [vmem:[#allocation5 + $0x14] sm:$0xf]
    %v506 = vld [vmem:[#allocation5 + $0x18] sm:$0xf]
    %v507 = vld [vmem:[#allocation5 + $0x1c] sm:$0xf]
    %v508 = vld [vmem:[#allocation5 + $0x20] sm:$0xf]
    %v509 = vld [vmem:[#allocation5 + $0x24] sm:$0xf]
    %v510 = vld [vmem:[#allocation5 + $0x28] sm:$0xf]
    %v511 = vld [vmem:[#allocation5 + $0x2c] sm:$0xf]
    %v512 = vld [vmem:[#allocation5 + $0x30] sm:$0xf]
    %v513 = vld [vmem:[#allocation5 + $0x34] sm:$0xf]
    %v514 = vld [vmem:[#allocation5 + $0x38] sm:$0xf]
    %v515 = vld [vmem:[#allocation5 + $0x3c] sm:$0xf]
    %v516 = vld [vmem:[%s5] sm:$0x1]
    %v518 = vlaneseq
    %v519 = vshrl.u32 %v518, 7
    %v520 = vsub.s32 0, %v519
    %v521 = vrot.slane %v516, %v520
    %v539 = vunpack.c.l.b16 %v500
    %v540 = vunpack.c.l.b16 %v501
    %v541 = vunpack.c.l.b16 %v502
    %v542 = vunpack.c.l.b16 %v503
    %v543 = vunpack.c.l.b16 %v504
    %v544 = vunpack.c.l.b16 %v505
    %v545 = vunpack.c.l.b16 %v506
    %v546 = vunpack.c.l.b16 %v507
    %v547 = vunpack.c.l.b16 %v508
    %v548 = vunpack.c.l.b16 %v509
    %v549 = vunpack.c.l.b16 %v510
    %v550 = vunpack.c.l.b16 %v511
    %v551 = vunpack.c.l.b16 %v512
    %v552 = vunpack.c.l.b16 %v513
    %v553 = vunpack.c.l.b16 %v514
    %v554 = vunpack.c.l.b16 %v515
    %v555 = vpack.c.b16 %v540, %v539
    %v556 = vpack.c.b16 %v542, %v541
    %v557 = vpack.c.b16 %v544, %v543
    %v558 = vpack.c.b16 %v546, %v545
    %v559 = vpack.c.b16 %v548, %v547
    %v560 = vpack.c.b16 %v550, %v549
    %v561 = vpack.c.b16 %v552, %v551
    %v562 = vpack.c.b16 %v554, %v553
    %571 = vmatprep.subr.bf16.mxu0 0
    %572 = vmatpush1.bf16.msra.mxu0 %v555
    %573 = vmatprep.subr.bf16.mxu0 0
    %574 = vmatpush1.bf16.msra.mxu0 %v556
    %575 = vmatprep.subr.bf16.mxu0 0
    %576 = vmatpush1.bf16.msra.mxu0 %v557
    %577 = vmatprep.subr.bf16.mxu0 0
    %578 = vmatpush1.bf16.msra.mxu0 %v558
    %579 = vmatprep.subr.bf16.mxu0 0
    %580 = vmatpush1.bf16.msra.mxu0 %v559
    %581 = vmatprep.subr.bf16.mxu0 0
    %582 = vmatpush1.bf16.msra.mxu0 %v560
    %583 = vmatprep.subr.bf16.mxu0 0
    %584 = vmatpush1.bf16.msra.mxu0 %v561
    %585 = vmatprep.subr.bf16.mxu0 0
    %586 = vmatpush1.bf16.msra.mxu0 %v562
    %587 = vmatprep.subr.bf16.mxu0 0
    %588 = vmatpush1.bf16.msra.mxu0 0
    %589 = vmatprep.subr.bf16.mxu0 0
    %590 = vmatpush1.bf16.msra.mxu0 0
    %591 = vmatprep.subr.bf16.mxu0 0
    %592 = vmatpush1.bf16.msra.mxu0 0
    %593 = vmatprep.subr.bf16.mxu0 0
    %594 = vmatpush1.bf16.msra.mxu0 0
    %595 = vmatprep.subr.bf16.mxu0 0
    %596 = vmatpush1.bf16.msra.mxu0 0
    %597 = vmatprep.subr.bf16.mxu0 0
    %598 = vmatpush1.bf16.msra.mxu0 0
    %599 = vmatprep.subr.bf16.mxu0 0
    %600 = vmatpush1.bf16.msra.mxu0 0
    %601 = vmatprep.subr.bf16.mxu0 0
    %602 = vmatpush1.bf16.msra.mxu0 0
    %603 = vmatprep.mubr.bf16.mxu0 0
    %604 = vmatmul.mubr.bf16.gmra.mrb[0].mxu0 %v499
    %v605 = vpop.f32.mrb[0].mxu0
    %v606 = vadd.f32 %v521, %v605
    %v607 = vpop.f32.mrb[0].mxu0
    %v608 = vpop.f32.mrb[0].mxu0
    %v609 = vpop.f32.mrb[0].mxu0
    %610 = vdwg.mxu0
    %611 = vst [vmem:[#allocation7] sm:$0xff] %v606
    // Predicated region
    $region34: #{tpu_custom_call.1} parent=1 // pred_check
      _
    $region35: #{tpu_custom_call.1} parent=1 // pred_check_branch
      %613 = sbr.rel (0) target = $region37
    $region36: #{tpu_custom_call.1} parent=1 // pred_region
      %s615 = ssub.s32 128, 128
      %616 = vsyncadd [#allocation4], %s615
      %s618 = sshll.u32 [#allocation7], 4
      %s619 = int_to_ptr.vmem [resolvable:$true] %s618
      %621 = dma.vmem_to_hbm [thread:$0]  %s619, 128, %s6, [#allocation4]
    $region37: #{tpu_custom_call.1} parent=1 // pred_fallthru
      _
    // Predicated region
    $region38: #{tpu_custom_call.1} parent=1 // pred_check
      _
    $region39: #{tpu_custom_call.1} parent=1 // pred_check_branch
      %623 = sbr.rel (0) target = $region41
    $region40: #{tpu_custom_call.1} parent=1 // pred_region
      %624 = dma.done [#allocation4], 128
    $region41: #{tpu_custom_call.1} parent=1 // pred_fallthru
      _
    %625 = vsyncpa [#allocation3], 1
    %626 = vsyncpa [#allocation6], 1
    %627 = vsyncpa [#allocation4], 1

</llo_original>
